<compile_context>
chip_gen: v5e
topology: v5e:2x2
jax: 0.10.0
libtpu: 0.0.40
codegen_flags: <defaults>
</compile_context>

<pallas_src>
import jax
import jax.numpy as jnp
from jax.experimental import pallas as pl
from jax.experimental.pallas import tpu as pltpu

NUM_CLASSES = 5
C_SUB = 8  # classes padded to one sublane group for the CE (classes-on-sublanes) layout


def _round_up(x, m):
    return (x + m - 1) // m * m


def _vmem_budget_bytes():
    """Generation-aware planning budget + scoped VMEM limit (bytes)."""
    cap = 64 * 1024 * 1024  # conservative fallback (v7x physical VMEM per TC)
    try:
        cap = int(pltpu.get_tpu_info().vmem_capacity_bytes)
    except Exception:
        pass
    # v5e/v6e (128 MiB) -> 32 MiB planning budget, 64 MiB scoped limit.
    # v7x   (64 MiB)    -> 16 MiB planning budget, 32 MiB scoped limit.
    budget = min(max(cap // 4, 8 * 1024 * 1024), 32 * 1024 * 1024)
    vmem_limit = min(cap // 2, 2 * budget + 8 * 1024 * 1024)
    return budget, vmem_limit


def _pick_tile_b(batch, d, budget):
    """Rows per grid step, derived purely from the VMEM budget (no artificial small cap)."""
    # Double-buffered f32 x tile + lane-padded double-buffered output tile + temporaries slack.
    per_row = 8 * d + 3 * 1024
    tile = max(8, budget // per_row)
    if batch >= 256:
        # Guarantee >= 2 grid steps so a 2-TensorCore chip (v7x) can shard the parallel axis.
        tile = min(tile, _round_up(pl.cdiv(batch, 2), 128))
    if tile >= batch:
        return _round_up(batch, 8)          # single tile covers the whole batch
    return max(128, (tile // 128) * 128)    # multi-tile: keep tile_b lane-dense (mult. of 128)


def _make_linear_kernel(compute_dtype):
    def kernel(x_ref, wt_ref, b_ref, o_ref):
        # y_pred = x @ W^T + b ; W pre-transposed to (D, 5), bias as (1, 5).
        x = x_ref[...].astype(compute_dtype)
        wt = wt_ref[...].astype(compute_dtype)
        o_ref[...] = (
            jnp.dot(x, wt, preferred_element_type=jnp.float32) + b_ref[...]
        )
    return kernel


def _make_ce_kernel(actual_b, tile_b, compute_dtype):
    def kernel(x_ref, w_ref, b_ref, y_ref, loss_ref):
        i = pl.program_id(0)
        x = x_ref[...].astype(compute_dtype)       # (tile_b, D)
        w = w_ref[...].astype(compute_dtype)       # (C_SUB, D), rows >= NUM_CLASSES are zero
        # Classes on sublanes, batch on lanes: logits_t = W_pad @ x^T -> (C_SUB, tile_b).
        logits = jax.lax.dot_general(
            w, x,
            dimension_numbers=(((1,), (1,)), ((), ())),
            preferred_element_type=jnp.float32,
        ) + b_ref[...]                              # bias (C_SUB, 1) broadcasts over lanes

        cls = jax.lax.broadcasted_iota(jnp.int32, logits.shape, 0)   # class id per sublane
        masked = jnp.where(cls < NUM_CLASSES, logits, -jnp.inf)       # kill padded classes
        m = jnp.max(masked, axis=0, keepdims=True)                    # (1, tile_b) sublane max
        lse = jnp.log(jnp.sum(jnp.exp(masked - m), axis=0, keepdims=True)) + m

        # TODO(synk): labels are assumed to lie in [0, NUM_CLASSES); invalid labels are not
        # detected (PyTorch would raise), they just yield picked == 0 for that row.
        labels = y_ref[...]                                           # (1, tile_b) int32
        picked = jnp.sum(jnp.where(cls == labels, logits, 0.0),
                         axis=0, keepdims=True)                       # (1, tile_b)

        # Zero out lanes that only exist because of batch-tail padding (also kills any
        # NaN/Inf coming from undefined tail rows of the x block).
        pos = jax.lax.broadcasted_iota(jnp.int32, (1, tile_b), 1) + i * tile_b
        loss_ref[...] = jnp.where(pos < actual_b, lse - picked, 0.0)
    return kernel


def torch_model_forward(x, weight, bias, y=None, compute_dtype=jnp.float32):
    """Mirrors TorchModel.forward: returns logits (B, 5) if y is None, else scalar mean CE loss.

    compute_dtype: jnp.float32 matches PyTorch numerics; jnp.bfloat16 is an explicit
    lower-precision knob (MXU-native) if the caller wants it.
    """
    B, D = x.shape
    budget, vmem_limit = _vmem_budget_bytes()
    tile_b = _pick_tile_b(B, D, budget)
    num_tiles = pl.cdiv(B, tile_b)

    x_f32 = x.astype(jnp.float32)
    x_spec = pl.BlockSpec((tile_b, D), lambda i: (i, 0))
    cparams = pltpu.CompilerParams(
        dimension_semantics=("parallel",),
        vmem_limit_bytes=vmem_limit,
    )

    if y is None:
        w_t = weight.T.astype(jnp.float32)                 # (D, 5)
        bias_row = bias.reshape(1, NUM_CLASSES).astype(jnp.float32)
        cost = pl.CostEstimate(
            flops=2 * B * D * NUM_CLASSES,
            transcendentals=0,
            bytes_accessed=(B * D * 4 + D * NUM_CLASSES * 4
                            + NUM_CLASSES * 4 + B * NUM_CLASSES * 4),
        )
        logits = pl.pallas_call(
            _make_linear_kernel(compute_dtype),
            out_shape=jax.ShapeDtypeStruct((B, NUM_CLASSES), jnp.float32),
            grid=(num_tiles,),
            in_specs=[
                x_spec,
                pl.BlockSpec((D, NUM_CLASSES), lambda i: (0, 0)),      # resident across grid
                pl.BlockSpec((1, NUM_CLASSES), lambda i: (0, 0)),      # resident across grid
            ],
            out_specs=pl.BlockSpec((tile_b, NUM_CLASSES), lambda i: (i, 0)),
            compiler_params=cparams,
            cost_estimate=cost,
        )(x_f32, w_t, bias_row)
        return logits

    # Cross-entropy branch: classes on sublanes (padded 5 -> 8), batch on lanes.
    L = num_tiles * tile_b
    w_ce = (jnp.zeros((C_SUB, D), jnp.float32)
            .at[:NUM_CLASSES].set(weight.astype(jnp.float32)))
    b_ce = (jnp.zeros((C_SUB, 1), jnp.float32)
            .at[:NUM_CLASSES, 0].set(bias.astype(jnp.float32)))
    y_row = jnp.zeros((1, L), jnp.int32).at[0, :B].set(y.astype(jnp.int32))

    cost = pl.CostEstimate(
        flops=2 * B * D * C_SUB,
        transcendentals=B * (C_SUB + 1),
        bytes_accessed=B * D * 4 + C_SUB * D * 4 + C_SUB * 4 + L * 4 + L * 4,
    )
    per_example = pl.pallas_call(
        _make_ce_kernel(B, tile_b, compute_dtype),
        out_shape=jax.ShapeDtypeStruct((1, L), jnp.float32),
        grid=(num_tiles,),
        in_specs=[
            x_spec,
            pl.BlockSpec((C_SUB, D), lambda i: (0, 0)),   # resident across grid
            pl.BlockSpec((C_SUB, 1), lambda i: (0, 0)),   # resident across grid
            pl.BlockSpec((1, tile_b), lambda i: (0, i)),
        ],
        out_specs=pl.BlockSpec((1, tile_b), lambda i: (0, i)),
        compiler_params=cparams,
        cost_estimate=cost,
    )(x_f32, w_ce, b_ce, y_row)
    # Padded lanes are zeroed in-kernel; mean over real examples on host keeps the grid parallel.
    return jnp.sum(per_example) / B


def _reference(x, weight, bias, y=None):
    logits = x @ weight.T + bias
    if y is None:
        return logits
    lse = jax.scipy.special.logsumexp(logits, axis=-1)
    picked = jnp.take_along_axis(logits, y[:, None], axis=-1)[:, 0]
    return jnp.mean(lse - picked)


if __name__ == "__main__":
    input_size = 32
    batch = 8

    key = jax.random.PRNGKey(0)
    kx, kw, kb, ky = jax.random.split(key, 4)

    # Deterministic synthetic parameters (same shapes as nn.Linear(input_size, 5)).
    weight = jax.random.normal(kw, (NUM_CLASSES, input_size), dtype=jnp.float32) * 0.1
    bias = jax.random.normal(kb, (NUM_CLASSES,), dtype=jnp.float32) * 0.1

    x = jax.random.normal(kx, (batch, input_size), dtype=jnp.float32)
    y = jax.random.randint(ky, (batch,), 0, NUM_CLASSES, dtype=jnp.int32)

    # Inference branch (y is None): returns logits (B, 5).
    logits = jax.block_until_ready(torch_model_forward(x, weight, bias, y=None))

    # Training branch (y given): returns scalar mean cross-entropy loss.
    loss = jax.block_until_ready(torch_model_forward(x, weight, bias, y=y))

    # Correctness vs. pure-JAX reference.
    ref_logits = _reference(x, weight, bias)
    ref_loss = _reference(x, weight, bias, y)
    assert logits.shape == (batch, NUM_CLASSES)
    assert jnp.allclose(logits, ref_logits, atol=1e-2, rtol=1e-2), (
        jnp.max(jnp.abs(logits - ref_logits)))
    assert jnp.allclose(loss, ref_loss, atol=1e-2, rtol=1e-2), (loss, ref_loss)

    print("KERNEL_OK")
</pallas_src>

<mosaic_0001>
module attributes {stable_mosaic.version = 11 : i64} {
  func.func @kernel(%arg0: i32, %arg1: memref<8x32xf32, #tpu.memory_space<vmem>>, %arg2: memref<32x5xf32, #tpu.memory_space<vmem>>, %arg3: memref<1x5xf32, #tpu.memory_space<vmem>>, %arg4: memref<8x5xf32, #tpu.memory_space<vmem>>) attributes {dimension_semantics = [#tpu.dimension_semantics<parallel>], iteration_bounds = array<i64: 1>, scalar_prefetch = 0 : i64, scratch_operands = 0 : i64, tpu.core_type = #tpu.core_type<tc>, window_params = [{transform_indices = @transform_0, window_bounds = array<i64: 8, 32>}, {pipeline_mode = #tpu.pipeline_mode<synchronous>, transform_indices = @transform_1, window_bounds = array<i64: 32, 5>}, {pipeline_mode = #tpu.pipeline_mode<synchronous>, transform_indices = @transform_2, window_bounds = array<i64: 1, 5>}, {transform_indices = @transform_3, window_bounds = array<i64: 8, 5>}]} {
    %c0 = arith.constant 0 : index
    %c0_0 = arith.constant 0 : index
    %0 = vector.load %arg1[%c0, %c0_0] : memref<8x32xf32, #tpu.memory_space<vmem>>, vector<8x32xf32>
    %c0_1 = arith.constant 0 : index
    %c0_2 = arith.constant 0 : index
    %1 = vector.load %arg2[%c0_1, %c0_2] : memref<32x5xf32, #tpu.memory_space<vmem>>, vector<32x5xf32>
    %cst = arith.constant dense<0.000000e+00> : vector<8x5xf32>
    %2 = tpu.matmul %0, %1, %cst {dimension_numbers = #tpu.dot_dimension_numbers<[1], [0], [0], [1], [0, 0, 1, 1], [], []>} : vector<8x32xf32>, vector<32x5xf32>, vector<8x5xf32> -> vector<8x5xf32>
    %c0_3 = arith.constant 0 : index
    %c0_4 = arith.constant 0 : index
    %3 = vector.load %arg3[%c0_3, %c0_4] : memref<1x5xf32, #tpu.memory_space<vmem>>, vector<1x5xf32>
    %4 = vector.broadcast %3 : vector<1x5xf32> to vector<8x5xf32>
    %5 = arith.addf %2, %4 : vector<8x5xf32>
    %c0_5 = arith.constant 0 : index
    %c0_6 = arith.constant 0 : index
    %6 = vector.load %arg4[%c0_5, %c0_6] : memref<8x5xf32, #tpu.memory_space<vmem>>, vector<8x5xf32>
    tpu.vector_store %arg4[%c0_5, %c0_6], %5 {strides = array<i32>} : memref<8x5xf32, #tpu.memory_space<vmem>>, vector<8x5xf32>,
    return
  }
  func.func @transform_0(%arg0: i32) -> (i32, i32) {
    %c0_i32 = arith.constant 0 : i32
    %c0_i32_0 = arith.constant 0 : i32
    return %arg0, %c0_i32 : i32, i32
  }
  func.func @transform_1(%arg0: i32) -> (i32, i32) {
    %c0_i32 = arith.constant 0 : i32
    %c0_i32_0 = arith.constant 0 : i32
    %c0_i32_1 = arith.constant 0 : i32
    return %c0_i32, %c0_i32_0 : i32, i32
  }
  func.func @transform_2(%arg0: i32) -> (i32, i32) {
    %c0_i32 = arith.constant 0 : i32
    %c0_i32_0 = arith.constant 0 : i32
    %c0_i32_1 = arith.constant 0 : i32
    return %c0_i32, %c0_i32_0 : i32, i32
  }
  func.func @transform_3(%arg0: i32) -> (i32, i32) {
    %c0_i32 = arith.constant 0 : i32
    %c0_i32_0 = arith.constant 0 : i32
    return %arg0, %c0_i32 : i32, i32
  }
}

</mosaic_0001>

<llo_original>
// kernel: tpu_custom_call.1
$region0: #{tpu_custom_call.1}
  #allocation0 [shape = 'u32[]', space=smem, size = 0x4, offset = 0x4, fixed_abs, tag = 'smem constant byte address 0x4 - core index']
  #allocation1 [shape = 'u32[72,128]{1,0:T(1,128)}', space=vmem, size = 0x9000, scoped, tag = 'internal scratch']
  %s0 = inlined_call_operand.vmem [shape: f32[8,32], index: 0, kind: input, shape index: {}]
  %s1 = inlined_call_operand.vmem [shape: f32[32,5], index: 1, kind: input, shape index: {}]
  %s2 = inlined_call_operand.vmem [shape: f32[1,5], index: 2, kind: input, shape index: {}]
  %s3 = inlined_call_operand.hbm [shape: f32[8,5], index: 3, kind: output, shape index: {}]
  %s4 = sld [smem:[#allocation0]]
  $region22: #{tpu_custom_call.1} parent=0
    _
  %s6 = ssub.s32 1, %s4
  %s7 = scalar_select 0, %s6, %s4
  $region1: #{tpu_custom_call.1} parent=0
    #allocation2 [shape = 'u8[4096]{0}', space=vmem, size = 0x1000, scoped, tag = 'output window, operand 0, single buffered']
    #allocation3 [shape = 's32[1]{0}', space=sflag, size = 0x4, scoped, tag = 'scoped memory for tpu_custom_call.1']
    %8 = vsyncpa [#allocation3], 0
    // Predicated region
    $region2: #{tpu_custom_call.1} parent=1 // pred_check
      _
    $region3: #{tpu_custom_call.1} parent=1 // pred_check_branch
      %10 = sbr.rel (0) target = $region5
    $region4: #{tpu_custom_call.1} parent=1 // pred_region
      _
    $region5: #{tpu_custom_call.1} parent=1 // pred_fallthru
      _
    // Predicated region
    $region6: #{tpu_custom_call.1} parent=1 // pred_check
      _
    $region7: #{tpu_custom_call.1} parent=1 // pred_check_branch
      %12 = sbr.rel (0) target = $region9
    $region8: #{tpu_custom_call.1} parent=1 // pred_region
      _
    $region9: #{tpu_custom_call.1} parent=1 // pred_fallthru
      _
    // Predicated region
    $region10: #{tpu_custom_call.1} parent=1 // pred_check
      _
    $region11: #{tpu_custom_call.1} parent=1 // pred_check_branch
      %14 = sbr.rel (0) target = $region13
    $region12: #{tpu_custom_call.1} parent=1 // pred_region
      _
    $region13: #{tpu_custom_call.1} parent=1 // pred_fallthru
      _
    %v15 = vld [vmem:[%s0] sm:$0xff]
    %v16 = vld [vmem:[%s1] sm:$0xff]
    %v17 = vld [vmem:[%s1 + $0x8] sm:$0xff]
    %v18 = vld [vmem:[%s1 + $0x10] sm:$0xff]
    %v19 = vld [vmem:[%s1 + $0x18] sm:$0xff]
    %v20 = vld [vmem:[%s2] sm:$0x1]
    %v22 = vperm.slane %v20, 0
    %vm24 = vcmask 261120
    %v26 = vsel %vm24, %v15, 0
    %28 = vmatpush.msra.mxu0 0.0
    %29 = vmatpush.msra.mxu0 0.0
    %30 = vmatpush.msra.mxu0 0.0
    %31 = vmatpush.msra.mxu0 0.0
    %32 = vmatpush.msra.mxu0 0.0
    %33 = vmatpush.msra.mxu0 0.0
    %34 = vmatpush.msra.mxu0 0.0
    %35 = vmatpush.msra.mxu0 0.0
    %36 = vmatpush.msra.mxu0 0.0
    %37 = vmatpush.msra.mxu0 0.0
    %38 = vmatpush.msra.mxu0 0.0
    %39 = vmatpush.msra.mxu0 0.0
    %40 = vmatpush.msra.mxu0 %v19
    %41 = vmatpush.msra.mxu0 %v18
    %42 = vmatpush.msra.mxu0 %v17
    %43 = vmatpush.msra.mxu0 %v16
    %44 = vmatmul.f32.gmra.mxu0 %v26
    %v45 = vpop.f32.mrf.mxu0
    %v46 = vadd.f32 %v22, %v45
    %47 = vdwg.mxu0
    %vm48 = vcmask 39936
    %49 = vst.msk [vmem:[#allocation2] sm:$0xff] %vm48, %v46
    // Predicated region
    $region14: #{tpu_custom_call.1} parent=1 // pred_check
      _
    $region15: #{tpu_custom_call.1} parent=1 // pred_check_branch
      %51 = sbr.rel (0) target = $region17
    $region16: #{tpu_custom_call.1} parent=1 // pred_region
      %53 = vsyncadd [#allocation3], 0
      %s55 = sshll.u32 [#allocation2], 4
      %s56 = int_to_ptr.vmem [resolvable:$true] %s55
      %s57 = sshll.u32 %s3, 4
      %s58 = int_to_ptr.hbm [resolvable:$true] %s57
      %60 = dma.vmem_to_hbm [thread:$0]  %s56, 128, %s58, [#allocation3]
    $region17: #{tpu_custom_call.1} parent=1 // pred_fallthru
      _
    // Predicated region
    $region18: #{tpu_custom_call.1} parent=1 // pred_check
      _
    $region19: #{tpu_custom_call.1} parent=1 // pred_check_branch
      %62 = sbr.rel (0) target = $region21
    $region20: #{tpu_custom_call.1} parent=1 // pred_region
      %64 = dma.done [#allocation3], 128
    $region21: #{tpu_custom_call.1} parent=1 // pred_fallthru
      _
    %65 = vsyncpa [#allocation3], 1

</llo_original>
